<compile_context>
chip_gen: v7x
topology: tpu7x:2x2x1
jax: 0.10.0
libtpu: 0.0.40
codegen_flags: <defaults>
</compile_context>

<pallas_src>
import jax
import jax.numpy as jnp
import numpy as np
from jax import lax
from jax.experimental import pallas as pl
from jax.experimental.pallas import tpu as pltpu

HIDDEN1 = 128       # first hidden width (already lane/sublane friendly)
HIDDEN2 = 64        # true second hidden width (PyTorch module)
H2_PAD = 128        # zero-padded second hidden width (lane/sublane dense)


# ----------------------------------------------------------------------------
# Deterministic parameter init (mirrors layer_init: orthogonal weight, const bias)
# PyTorch layout: weight (out, in), bias (out,)
# ----------------------------------------------------------------------------
def orthogonal_init(key, out_dim, in_dim, gain):
    rows, cols = out_dim, in_dim
    n_big, n_small = max(rows, cols), min(rows, cols)
    a = jax.random.normal(key, (n_big, n_small), dtype=jnp.float32)
    q, r = jnp.linalg.qr(a)
    d = jnp.diag(r)
    q = q * jnp.where(d >= 0, 1.0, -1.0)[None, :]   # sign fix (never zero)
    if rows < cols:
        q = q.T
    return (gain * q[:rows, :cols]).astype(jnp.float32)


def make_critic_params(state_dim, key):
    k1, k2, k3 = jax.random.split(key, 3)
    std = float(np.sqrt(2.0))
    return dict(
        w1=orthogonal_init(k1, HIDDEN1, state_dim, std),   # (128, S)
        b1=jnp.zeros((HIDDEN1,), jnp.float32),
        w2=orthogonal_init(k2, HIDDEN2, HIDDEN1, std),     # (64, 128)
        b2=jnp.zeros((HIDDEN2,), jnp.float32),
        w3=orthogonal_init(k3, 1, HIDDEN2, 1.0),           # (1, 64)
        b3=jnp.zeros((1,), jnp.float32),
    )


def prepare_kernel_params(params, compute_dtype):
    """Feature-major (out, in) weights, layer 2/3 zero-padded 64->128, MXU dtype cast."""
    w1 = params["w1"].astype(compute_dtype)                          # (128, S)
    b1 = params["b1"].reshape(HIDDEN1, 1).astype(jnp.float32)        # (128, 1)
    w2 = jnp.zeros((H2_PAD, HIDDEN1), jnp.float32).at[:HIDDEN2, :].set(params["w2"])
    w2 = w2.astype(compute_dtype)                                    # (128, 128)
    b2 = jnp.zeros((H2_PAD, 1), jnp.float32).at[:HIDDEN2, 0].set(params["b2"])
    w3 = jnp.zeros((1, H2_PAD), jnp.float32).at[0, :HIDDEN2].set(params["w3"][0])
    w3 = w3.astype(compute_dtype)                                    # (1, 128)
    b3 = params["b3"].reshape(1).astype(jnp.float32)                 # (1,) scalar -> SMEM
    return w1, b1, w2, b2, w3, b3


# ----------------------------------------------------------------------------
# Pallas kernel: one batch tile per grid step; batch is the lane dimension.
# ----------------------------------------------------------------------------
def critic_kernel(x_ref, w1_ref, b1_ref, w2_ref, b2_ref, w3_ref, b3_ref, o_ref):
    # x_ref: (S, TB) f32     w1: (128, S)   w2: (128, 128)   w3: (1, 128)
    # b1/b2: (128, 1) f32    b3: SMEM (1,) f32                o_ref: (1, TB) f32
    cdt = w1_ref.dtype
    x = x_ref[...].astype(cdt)                                   # in-kernel MXU cast
    h1 = jnp.tanh(
        jnp.dot(w1_ref[...], x, preferred_element_type=jnp.float32) + b1_ref[...]
    )                                                            # (128, TB) f32
    h2 = jnp.tanh(
        jnp.dot(w2_ref[...], h1.astype(cdt), preferred_element_type=jnp.float32)
        + b2_ref[...]
    )                                                            # (128, TB); rows 64: exact 0 contrib
    v = jnp.dot(w3_ref[...], h2.astype(cdt),
                preferred_element_type=jnp.float32)              # (1, TB) lane-dense
    o_ref[...] = (v + b3_ref[0]).astype(o_ref.dtype)


def _pick_tile_b(batch):
    # Large tiles amortize the ~0.35 us per-grid-step cost, but keep >= ~4 grid
    # steps so the two v7x TensorCores each get work and the pipeline overlaps.
    t = -(-batch // 4)                    # cdiv(batch, 4)
    t = ((t + 255) // 256) * 256          # round up to a lane-friendly multiple
    return max(256, min(2048, t))


def critic_forward(state, params, *, tile_b=None, compute_dtype=jnp.bfloat16):
    """state: (B, state_dim) float32 -> (B, 1) float32.

    Use compute_dtype=jnp.float32 on v5e (no bf16 VPU path; kernel is DMA-bound
    anyway) or when f32-exact values are required.
    """
    state = jnp.asarray(state, jnp.float32)
    B, S = state.shape
    w1, b1, w2, b2, w3, b3 = prepare_kernel_params(params, compute_dtype)

    if tile_b is None:
        tile_b = _pick_tile_b(B)
    num_tiles = pl.cdiv(B, tile_b)
    b_pad = num_tiles * tile_b

    # One relayout pass: (B, S) -> (S, b_pad), batch on lanes, ragged tail zeroed.
    # Callers that can store the state feature-major should hand it in directly.
    if b_pad != B:
        x_t = jnp.zeros((S, b_pad), jnp.float32).at[:, :B].set(state.T)
    else:
        x_t = state.T

    out = pl.pallas_call(
        critic_kernel,
        out_shape=jax.ShapeDtypeStruct((1, b_pad), jnp.float32),
        grid=(num_tiles,),
        in_specs=[
            pl.BlockSpec((S, tile_b), lambda i: (0, i)),            # state tile (pipelined)
            pl.BlockSpec((HIDDEN1, S), lambda i: (0, 0)),           # w1 resident
            pl.BlockSpec((HIDDEN1, 1), lambda i: (0, 0)),           # b1 resident
            pl.BlockSpec((H2_PAD, HIDDEN1), lambda i: (0, 0)),      # w2 resident
            pl.BlockSpec((H2_PAD, 1), lambda i: (0, 0)),            # b2 resident
            pl.BlockSpec((1, H2_PAD), lambda i: (0, 0)),            # w3 resident
            pl.BlockSpec(memory_space=pltpu.MemorySpace.SMEM),      # b3 scalar
        ],
        out_specs=pl.BlockSpec((1, tile_b), lambda i: (0, i)),
        compiler_params=pltpu.CompilerParams(
            dimension_semantics=("parallel",),
            vmem_limit_bytes=32 * 1024 * 1024,
        ),
    )(x_t, w1, b1, w2, b2, w3, b3)

    return out[0, :B].reshape(B, 1)


# ----------------------------------------------------------------------------
# Pure-JAX reference (PyTorch semantics), with optional matching MXU dtype.
# ----------------------------------------------------------------------------
def _reference_forward(state, params, compute_dtype=jnp.float32):
    cdt = compute_dtype
    hp = lax.Precision.HIGHEST
    x = state.astype(cdt)
    w1 = params["w1"].T.astype(cdt)
    w2 = params["w2"].T.astype(cdt)
    w3 = params["w3"].T.astype(cdt)
    h1 = jnp.tanh(jnp.dot(x, w1, preferred_element_type=jnp.float32, precision=hp)
                  + params["b1"][None, :])
    h2 = jnp.tanh(jnp.dot(h1.astype(cdt), w2, preferred_element_type=jnp.float32,
                          precision=hp)
                  + params["b2"][None, :])
    return (jnp.dot(h2.astype(cdt), w3, preferred_element_type=jnp.float32, precision=hp)
            + params["b3"][None, :])


if __name__ == "__main__":
    key = jax.random.PRNGKey(0)
    k_param, k_state, k_state2 = jax.random.split(key, 3)

    batch, state_dim = 300, 32           # non-multiple of tile to exercise tail padding
    params = make_critic_params(state_dim, k_param)
    state = jax.random.normal(k_state, (batch, state_dim), dtype=jnp.float32)

    # Full-f32 path: matches the reference closely (f32 MXU accumulation).
    out_f32 = jax.block_until_ready(
        critic_forward(state, params, compute_dtype=jnp.float32))
    ref_f32 = _reference_forward(state, params, jnp.float32)
    np.testing.assert_allclose(np.asarray(out_f32), np.asarray(ref_f32),
                               atol=1e-4, rtol=1e-4)
    assert out_f32.shape == (batch, 1)

    # Default bf16-MXU path (v6e/v7x native): compare against a dtype-matched reference.
    out_bf16 = jax.block_until_ready(critic_forward(state, params))
    ref_bf16 = _reference_forward(state, params, jnp.bfloat16)
    np.testing.assert_allclose(np.asarray(out_bf16), np.asarray(ref_bf16),
                               atol=1e-2, rtol=1e-2)
    assert out_bf16.shape == (batch, 1)

    # Odd shapes: tiny batch, state_dim not a multiple of 8.
    params_odd = make_critic_params(20, k_param)
    state_odd = jax.random.normal(k_state2, (7, 20), dtype=jnp.float32)
    out_odd = jax.block_until_ready(
        critic_forward(state_odd, params_odd, compute_dtype=jnp.float32))
    ref_odd = _reference_forward(state_odd, params_odd, jnp.float32)
    np.testing.assert_allclose(np.asarray(out_odd), np.asarray(ref_odd),
                               atol=1e-4, rtol=1e-4)
    assert out_odd.shape == (7, 1)

    print("KERNEL_OK")
</pallas_src>

<mosaic_0001>
module attributes {stable_mosaic.version = 11 : i64} {
  func.func @critic_kernel(%arg0: i32, %arg1: memref<32x256xf32, #tpu.memory_space<vmem>>, %arg2: memref<128x32xf32, #tpu.memory_space<vmem>>, %arg3: memref<128x1xf32, #tpu.memory_space<vmem>>, %arg4: memref<128x128xf32, #tpu.memory_space<vmem>>, %arg5: memref<128x1xf32, #tpu.memory_space<vmem>>, %arg6: memref<1x128xf32, #tpu.memory_space<vmem>>, %arg7: memref<1xf32, #tpu.memory_space<smem>>, %arg8: memref<1x256xf32, #tpu.memory_space<vmem>>) attributes {dimension_semantics = [#tpu.dimension_semantics<parallel>], iteration_bounds = array<i64: 2>, scalar_prefetch = 0 : i64, scratch_operands = 0 : i64, tpu.core_type = #tpu.core_type<tc>, window_params = [{transform_indices = @transform_0, window_bounds = array<i64: 32, 256>}, {pipeline_mode = #tpu.pipeline_mode<synchronous>, transform_indices = @transform_1, window_bounds = array<i64: 128, 32>}, {pipeline_mode = #tpu.pipeline_mode<synchronous>, transform_indices = @transform_2, window_bounds = array<i64: 128, 1>}, {pipeline_mode = #tpu.pipeline_mode<synchronous>, transform_indices = @transform_3, window_bounds = array<i64: 128, 128>}, {pipeline_mode = #tpu.pipeline_mode<synchronous>, transform_indices = @transform_4, window_bounds = array<i64: 128, 1>}, {pipeline_mode = #tpu.pipeline_mode<synchronous>, transform_indices = @transform_5, window_bounds = array<i64: 1, 128>}, {transform_indices = @transform_6, window_bounds = array<i64: 1>}, {transform_indices = @transform_7, window_bounds = array<i64: 1, 256>}]} {
    %c0 = arith.constant 0 : index
    %c0_0 = arith.constant 0 : index
    %0 = vector.load %arg1[%c0, %c0_0] : memref<32x256xf32, #tpu.memory_space<vmem>>, vector<32x256xf32>
    %c0_1 = arith.constant 0 : index
    %c0_2 = arith.constant 0 : index
    %1 = vector.load %arg2[%c0_1, %c0_2] : memref<128x32xf32, #tpu.memory_space<vmem>>, vector<128x32xf32>
    %cst = arith.constant dense<0.000000e+00> : vector<128x256xf32>
    %2 = tpu.matmul %1, %0, %cst {dimension_numbers = #tpu.dot_dimension_numbers<[1], [0], [0], [1], [0, 0, 1, 1], [], []>} : vector<128x32xf32>, vector<32x256xf32>, vector<128x256xf32> -> vector<128x256xf32>
    %c0_3 = arith.constant 0 : index
    %c0_4 = arith.constant 0 : index
    %3 = vector.load %arg3[%c0_3, %c0_4] : memref<128x1xf32, #tpu.memory_space<vmem>>, vector<128x1xf32>
    %4 = vector.broadcast %3 : vector<128x1xf32> to vector<128x256xf32>
    %5 = arith.addf %2, %4 : vector<128x256xf32>
    %6 = math.tanh %5 : vector<128x256xf32>
    %c0_5 = arith.constant 0 : index
    %c0_6 = arith.constant 0 : index
    %7 = vector.load %arg4[%c0_5, %c0_6] : memref<128x128xf32, #tpu.memory_space<vmem>>, vector<128x128xf32>
    %cst_7 = arith.constant dense<0.000000e+00> : vector<128x256xf32>
    %8 = tpu.matmul %7, %6, %cst_7 {dimension_numbers = #tpu.dot_dimension_numbers<[1], [0], [0], [1], [0, 0, 1, 1], [], []>} : vector<128x128xf32>, vector<128x256xf32>, vector<128x256xf32> -> vector<128x256xf32>
    %c0_8 = arith.constant 0 : index
    %c0_9 = arith.constant 0 : index
    %9 = vector.load %arg5[%c0_8, %c0_9] : memref<128x1xf32, #tpu.memory_space<vmem>>, vector<128x1xf32>
    %10 = vector.broadcast %9 : vector<128x1xf32> to vector<128x256xf32>
    %11 = arith.addf %8, %10 : vector<128x256xf32>
    %12 = math.tanh %11 : vector<128x256xf32>
    %c0_10 = arith.constant 0 : index
    %c0_11 = arith.constant 0 : index
    %13 = vector.load %arg6[%c0_10, %c0_11] : memref<1x128xf32, #tpu.memory_space<vmem>>, vector<1x128xf32>
    %cst_12 = arith.constant dense<0.000000e+00> : vector<1x256xf32>
    %14 = tpu.matmul %13, %12, %cst_12 {dimension_numbers = #tpu.dot_dimension_numbers<[1], [0], [0], [1], [0, 0, 1, 1], [], []>} : vector<1x128xf32>, vector<128x256xf32>, vector<1x256xf32> -> vector<1x256xf32>
    %c0_13 = arith.constant 0 : index
    %15 = memref.load %arg7[%c0_13] : memref<1xf32, #tpu.memory_space<smem>>
    %16 = vector.broadcast %15 : f32 to vector<1x256xf32>
    %17 = arith.addf %14, %16 : vector<1x256xf32>
    %c0_14 = arith.constant 0 : index
    %c0_15 = arith.constant 0 : index
    %18 = vector.load %arg8[%c0_14, %c0_15] : memref<1x256xf32, #tpu.memory_space<vmem>>, vector<1x256xf32>
    tpu.vector_store %arg8[%c0_14, %c0_15], %17 {strides = array<i32>} : memref<1x256xf32, #tpu.memory_space<vmem>>, vector<1x256xf32>,
    return
  }
  func.func @transform_0(%arg0: i32) -> (i32, i32) {
    %c0_i32 = arith.constant 0 : i32
    %c0_i32_0 = arith.constant 0 : i32
    return %c0_i32, %arg0 : i32, i32
  }
  func.func @transform_1(%arg0: i32) -> (i32, i32) {
    %c0_i32 = arith.constant 0 : i32
    %c0_i32_0 = arith.constant 0 : i32
    %c0_i32_1 = arith.constant 0 : i32
    return %c0_i32, %c0_i32_0 : i32, i32
  }
  func.func @transform_2(%arg0: i32) -> (i32, i32) {
    %c0_i32 = arith.constant 0 : i32
    %c0_i32_0 = arith.constant 0 : i32
    %c0_i32_1 = arith.constant 0 : i32
    return %c0_i32, %c0_i32_0 : i32, i32
  }
  func.func @transform_3(%arg0: i32) -> (i32, i32) {
    %c0_i32 = arith.constant 0 : i32
    %c0_i32_0 = arith.constant 0 : i32
    %c0_i32_1 = arith.constant 0 : i32
    return %c0_i32, %c0_i32_0 : i32, i32
  }
  func.func @transform_4(%arg0: i32) -> (i32, i32) {
    %c0_i32 = arith.constant 0 : i32
    %c0_i32_0 = arith.constant 0 : i32
    %c0_i32_1 = arith.constant 0 : i32
    return %c0_i32, %c0_i32_0 : i32, i32
  }
  func.func @transform_5(%arg0: i32) -> (i32, i32) {
    %c0_i32 = arith.constant 0 : i32
    %c0_i32_0 = arith.constant 0 : i32
    %c0_i32_1 = arith.constant 0 : i32
    return %c0_i32, %c0_i32_0 : i32, i32
  }
  func.func @transform_6(%arg0: i32) -> i32 {
    %c0_i32 = arith.constant 0 : i32
    %c0_i32_0 = arith.constant 0 : i32
    return %c0_i32 : i32
  }
  func.func @transform_7(%arg0: i32) -> (i32, i32) {
    %c0_i32 = arith.constant 0 : i32
    %c0_i32_0 = arith.constant 0 : i32
    return %c0_i32, %arg0 : i32, i32
  }
}

</mosaic_0001>

<llo_original>
// kernel: tpu_custom_call.1
$region0: #{tpu_custom_call.1}
  #allocation0 [shape = 'u32[]', space=smem, size = 0x4, offset = 0x4, fixed_abs, tag = 'smem constant byte address 0x4 - core index']
  #allocation1 [shape = 'u32[144,128]{1,0:T(1,128)}', space=vmem, size = 0x12000, scoped, tag = 'internal scratch']
  #allocation2 [shape = 'f32[1]{0:T(128)S(6)}', space=smem, size = 0x200, scoped, tag = 'scoped memory for tpu_custom_call.1']
  %s0 = inlined_call_operand.vmem [shape: f32[32,512], index: 0, kind: input, shape index: {}]
  %s1 = inlined_call_operand.vmem [shape: f32[128,32], index: 1, kind: input, shape index: {}]
  %s2 = inlined_call_operand.vmem [shape: f32[128,1], index: 2, kind: input, shape index: {}]
  %s3 = inlined_call_operand.vmem [shape: f32[128,128], index: 3, kind: input, shape index: {}]
  %s4 = inlined_call_operand.vmem [shape: f32[128,1], index: 4, kind: input, shape index: {}]
  %s5 = inlined_call_operand.vmem [shape: f32[1,128], index: 5, kind: input, shape index: {}]
  %s6 = inlined_call_operand.<no memory space> [shape: f32[1], index: 6, kind: input, shape index: {}]
  %s7 = inlined_call_operand.hbm [shape: f32[1,512], index: 7, kind: output, shape index: {}]
  %s8 = sld [smem:[#allocation0]]
  $region84: #{tpu_custom_call.1} parent=0
    _
  %s10 = ssub.s32 1, %s8
  %s11 = scalar_select 0, %s10, %s8
  %12 = sst [smem:[#allocation2]] %s6
  $region1: #{tpu_custom_call.1} parent=0
    #allocation3 [shape = 'u8[65536]{0}', space=vmem, size = 0x10000, scoped, tag = 'input window, operand 0']
    #allocation4 [shape = 'u8[2048]{0}', space=vmem, size = 0x800, scoped, tag = 'output window, operand 0']
    #allocation5 [shape = 's32[2]{0}', space=sflag, size = 0x8, scoped, tag = 'scoped memory for tpu_custom_call.1']
    %13 = vsyncpa [#allocation5], 0
    %s14 = scalar_lea.sflag [#allocation5], 1
    %15 = vsyncpa %s14, 0
    loop: start=0, step=1, limit=4
    $region2: #{tpu_custom_call.1} parent=1 // loop_pre_header
      _
    $region3: #{tpu_custom_call.1} parent=1 // loop_header
      %s17 = sphi 0, %s21
      %p18 = scmp.ge.s32.totalorder %s17, 4
      %s27 = sphi 0, %s29
      %s30 = sphi 0, %s27
      %s31 = sphi 0, %s30
      %s47 = sphi 0, %s31
      %s51 = sphi 0, %s51
      %s53 = sphi 0, %s51
      %s54 = sphi 0, %s53
      %s68 = sphi 0, %s54
      %s72 = sphi 0, %s72
      %s74 = sphi 0, %s72
      %s75 = sphi 0, %s74
      %s89 = sphi 0, %s75
      %s93 = sphi 0, %s93
      %s95 = sphi 0, %s93
      %s96 = sphi 0, %s95
      %s110 = sphi 0, %s96
      %s114 = sphi 0, %s114
      %s116 = sphi 0, %s114
      %s117 = sphi 0, %s116
      %s131 = sphi 0, %s117
      %s135 = sphi 0, %s135
      %s137 = sphi 0, %s135
      %s138 = sphi 0, %s137
      %s152 = sphi 0, %s138
      %s156 = sphi 0, %s156
      %s158 = sphi 0, %s156
      %s159 = sphi 0, %s158
      %s173 = sphi 0, %s159
      %s179 = sphi 0, %s181
      %s182 = sphi 0, %s179
      %s183 = sphi 0, %s182
      %s199 = sphi 0, %s183
    $region4: #{tpu_custom_call.1} parent=1 // loop_header_branch
      %20 = sbr.rel (%p18) target = $region8
    $region5: #{tpu_custom_call.1} parent=1 // loop_body
      %s22 = ssub.s32 %s17, 1
      %s23 = ssub.s32 %s17, 2
      %s24 = sadd.s32 %s17, 1
      %s25 = ssub.s32 %s17, %s24
      %p26 = scmp.eq.s32.totalorder %s25, 0
      %s28 = sadd.s32 %s27, 1
      %s29 = scalar_select %p26, %s27, %s28
      %p32 = pneg %p26
      %p33 = scmp.eq.s32.totalorder %s17, 1
      %p34 = por %p32, %p33
      %p35 = scmp.ne.s32.totalorder %s27, %s30
      %p36 = scmp.eq.s32.totalorder %s17, 0
      %p37 = por %p35, %p36
      %p38 = scmp.ne.s32.totalorder %s27, %s30
      %p39 = scmp.eq.s32.totalorder %s22, 1
      %p40 = por %p38, %p39
      %p41 = scmp.ne.s32.totalorder %s30, %s31
      %p42 = scmp.eq.s32.totalorder %s22, 0
      %p43 = por %p41, %p42
      %p44 = scmp.ne.s32.totalorder %s30, %s31
      %p45 = scmp.eq.s32.totalorder %s23, 1
      %p46 = por %p44, %p45
      %p48 = scmp.ne.s32.totalorder %s31, %s47
      %p49 = scmp.eq.s32.totalorder %s23, 0
      %p50 = por %p48, %p49
      %s52 = sadd.s32 %s51, 1
      %p55 = scmp.eq.s32.totalorder %s17, 1
      %p56 = scmp.ne.s32.totalorder %s51, %s53
      %p57 = scmp.eq.s32.totalorder %s17, 0
      %p58 = por %p56, %p57
      %p59 = scmp.ne.s32.totalorder %s51, %s53
      %p60 = scmp.eq.s32.totalorder %s22, 1
      %p61 = por %p59, %p60
      %p62 = scmp.ne.s32.totalorder %s53, %s54
      %p63 = scmp.eq.s32.totalorder %s22, 0
      %p64 = por %p62, %p63
      %p65 = scmp.ne.s32.totalorder %s53, %s54
      %p66 = scmp.eq.s32.totalorder %s23, 1
      %p67 = por %p65, %p66
      %p69 = scmp.ne.s32.totalorder %s54, %s68
      %p70 = scmp.eq.s32.totalorder %s23, 0
      %p71 = por %p69, %p70
      %s73 = sadd.s32 %s72, 1
      %p76 = scmp.eq.s32.totalorder %s17, 1
      %p77 = scmp.ne.s32.totalorder %s72, %s74
      %p78 = scmp.eq.s32.totalorder %s17, 0
      %p79 = por %p77, %p78
      %p80 = scmp.ne.s32.totalorder %s72, %s74
      %p81 = scmp.eq.s32.totalorder %s22, 1
      %p82 = por %p80, %p81
      %p83 = scmp.ne.s32.totalorder %s74, %s75
      %p84 = scmp.eq.s32.totalorder %s22, 0
      %p85 = por %p83, %p84
      %p86 = scmp.ne.s32.totalorder %s74, %s75
      %p87 = scmp.eq.s32.totalorder %s23, 1
      %p88 = por %p86, %p87
      %p90 = scmp.ne.s32.totalorder %s75, %s89
      %p91 = scmp.eq.s32.totalorder %s23, 0
      %p92 = por %p90, %p91
      %s94 = sadd.s32 %s93, 1
      %p97 = scmp.eq.s32.totalorder %s17, 1
      %p98 = scmp.ne.s32.totalorder %s93, %s95
      %p99 = scmp.eq.s32.totalorder %s17, 0
      %p100 = por %p98, %p99
      %p101 = scmp.ne.s32.totalorder %s93, %s95
      %p102 = scmp.eq.s32.totalorder %s22, 1
      %p103 = por %p101, %p102
      %p104 = scmp.ne.s32.totalorder %s95, %s96
      %p105 = scmp.eq.s32.totalorder %s22, 0
      %p106 = por %p104, %p105
      %p107 = scmp.ne.s32.totalorder %s95, %s96
      %p108 = scmp.eq.s32.totalorder %s23, 1
      %p109 = por %p107, %p108
      %p111 = scmp.ne.s32.totalorder %s96, %s110
      %p112 = scmp.eq.s32.totalorder %s23, 0
      %p113 = por %p111, %p112
      %s115 = sadd.s32 %s114, 1
      %p118 = scmp.eq.s32.totalorder %s17, 1
      %p119 = scmp.ne.s32.totalorder %s114, %s116
      %p120 = scmp.eq.s32.totalorder %s17, 0
      %p121 = por %p119, %p120
      %p122 = scmp.ne.s32.totalorder %s114, %s116
      %p123 = scmp.eq.s32.totalorder %s22, 1
      %p124 = por %p122, %p123
      %p125 = scmp.ne.s32.totalorder %s116, %s117
      %p126 = scmp.eq.s32.totalorder %s22, 0
      %p127 = por %p125, %p126
      %p128 = scmp.ne.s32.totalorder %s116, %s117
      %p129 = scmp.eq.s32.totalorder %s23, 1
      %p130 = por %p128, %p129
      %p132 = scmp.ne.s32.totalorder %s117, %s131
      %p133 = scmp.eq.s32.totalorder %s23, 0
      %p134 = por %p132, %p133
      %s136 = sadd.s32 %s135, 1
      %p139 = scmp.eq.s32.totalorder %s17, 1
      %p140 = scmp.ne.s32.totalorder %s135, %s137
      %p141 = scmp.eq.s32.totalorder %s17, 0
      %p142 = por %p140, %p141
      %p143 = scmp.ne.s32.totalorder %s135, %s137
      %p144 = scmp.eq.s32.totalorder %s22, 1
      %p145 = por %p143, %p144
      %p146 = scmp.ne.s32.totalorder %s137, %s138
      %p147 = scmp.eq.s32.totalorder %s22, 0
      %p148 = por %p146, %p147
      %p149 = scmp.ne.s32.totalorder %s137, %s138
      %p150 = scmp.eq.s32.totalorder %s23, 1
      %p151 = por %p149, %p150
      %p153 = scmp.ne.s32.totalorder %s138, %s152
      %p154 = scmp.eq.s32.totalorder %s23, 0
      %p155 = por %p153, %p154
      %s157 = sadd.s32 %s156, 1
      %p160 = scmp.eq.s32.totalorder %s17, 1
      %p161 = scmp.ne.s32.totalorder %s156, %s158
      %p162 = scmp.eq.s32.totalorder %s17, 0
      %p163 = por %p161, %p162
      %p164 = scmp.ne.s32.totalorder %s156, %s158
      %p165 = scmp.eq.s32.totalorder %s22, 1
      %p166 = por %p164, %p165
      %p167 = scmp.ne.s32.totalorder %s158, %s159
      %p168 = scmp.eq.s32.totalorder %s22, 0
      %p169 = por %p167, %p168
      %p170 = scmp.ne.s32.totalorder %s158, %s159
      %p171 = scmp.eq.s32.totalorder %s23, 1
      %p172 = por %p170, %p171
      %p174 = scmp.ne.s32.totalorder %s159, %s173
      %p175 = scmp.eq.s32.totalorder %s23, 0
      %p176 = por %p174, %p175
      %s177 = ssub.s32 %s17, %s24
      %p178 = scmp.eq.s32.totalorder %s177, 0
      %s180 = sadd.s32 %s179, 1
      %s181 = scalar_select %p178, %s179, %s180
      %p184 = pneg %p178
      %p185 = scmp.eq.s32.totalorder %s17, 1
      %p186 = por %p184, %p185
      %p187 = scmp.ne.s32.totalorder %s179, %s182
      %p188 = scmp.eq.s32.totalorder %s17, 0
      %p189 = por %p187, %p188
      %p190 = scmp.ne.s32.totalorder %s179, %s182
      %p191 = scmp.eq.s32.totalorder %s22, 1
      %p192 = por %p190, %p191
      %p193 = scmp.ne.s32.totalorder %s182, %s183
      %p194 = scmp.eq.s32.totalorder %s22, 0
      %p195 = por %p193, %p194
      %p196 = scmp.ne.s32.totalorder %s182, %s183
      %p197 = scmp.eq.s32.totalorder %s23, 1
      %p198 = por %p196, %p197
      %p200 = scmp.ne.s32.totalorder %s183, %s199
      %p201 = scmp.eq.s32.totalorder %s23, 0
      %p202 = por %p200, %p201
      %p203 = scmp.le.s32.totalorder 1, %s17
      %p204 = scmp.lt.s32.totalorder %s17, 3
      %p205 = pnand %p203, %p204
      %p206 = pneg %p205
      // Predicated region
      $region9: #{tpu_custom_call.1} parent=5 // pred_check
        _
      $region10: #{tpu_custom_call.1} parent=5 // pred_check_branch
        %208 = sbr.rel (%p205) target = $region12
      $region11: #{tpu_custom_call.1} parent=5 // pred_region
        %s209 = ssub.s32 %s17, 1
        // Predicated region
        $region13: #{tpu_custom_call.1} parent=11 // pred_check
          %p210 = pneg %p64
        $region14: #{tpu_custom_call.1} parent=11 // pred_check_branch
          %212 = sbr.rel (%p210) target = $region16
        $region15: #{tpu_custom_call.1} parent=11 // pred_region
          _
        $region16: #{tpu_custom_call.1} parent=11 // pred_fallthru
          _
        // Predicated region
        $region17: #{tpu_custom_call.1} parent=11 // pred_check
          %p213 = pneg %p85
        $region18: #{tpu_custom_call.1} parent=11 // pred_check_branch
          %215 = sbr.rel (%p213) target = $region20
        $region19: #{tpu_custom_call.1} parent=11 // pred_region
          _
        $region20: #{tpu_custom_call.1} parent=11 // pred_fallthru
          _
        // Predicated region
        $region21: #{tpu_custom_call.1} parent=11 // pred_check
          %p216 = pneg %p106
        $region22: #{tpu_custom_call.1} parent=11 // pred_check_branch
          %218 = sbr.rel (%p216) target = $region24
        $region23: #{tpu_custom_call.1} parent=11 // pred_region
          _
        $region24: #{tpu_custom_call.1} parent=11 // pred_fallthru
          _
        // Predicated region
        $region25: #{tpu_custom_call.1} parent=11 // pred_check
          %p219 = pneg %p127
        $region26: #{tpu_custom_call.1} parent=11 // pred_check_branch
          %221 = sbr.rel (%p219) target = $region28
        $region27: #{tpu_custom_call.1} parent=11 // pred_region
          _
        $region28: #{tpu_custom_call.1} parent=11 // pred_fallthru
          _
        // Predicated region
        $region29: #{tpu_custom_call.1} parent=11 // pred_check
          %p222 = pneg %p148
        $region30: #{tpu_custom_call.1} parent=11 // pred_check_branch
          %224 = sbr.rel (%p222) target = $region32
        $region31: #{tpu_custom_call.1} parent=11 // pred_region
          _
        $region32: #{tpu_custom_call.1} parent=11 // pred_fallthru
          _
        // Predicated region
        $region33: #{tpu_custom_call.1} parent=11 // pred_check
          %p225 = pneg %p169
        $region34: #{tpu_custom_call.1} parent=11 // pred_check_branch
          %227 = sbr.rel (%p225) target = $region36
        $region35: #{tpu_custom_call.1} parent=11 // pred_region
          _
        $region36: #{tpu_custom_call.1} parent=11 // pred_fallthru
          _
      $region12: #{tpu_custom_call.1} parent=5 // pred_fallthru
        _
      %p228 = scmp.lt.s32.totalorder %s17, 2
      // Predicated region
      $region37: #{tpu_custom_call.1} parent=5 // pred_check
        %p229 = pneg %p228
      $region38: #{tpu_custom_call.1} parent=5 // pred_check_branch
        %231 = sbr.rel (%p229) target = $region40
      $region39: #{tpu_custom_call.1} parent=5 // pred_region
        // Predicated region
        $region41: #{tpu_custom_call.1} parent=39 // pred_check
          %p232 = pneg %p37
        $region42: #{tpu_custom_call.1} parent=39 // pred_check_branch
          %234 = sbr.rel (%p232) target = $region44
        $region43: #{tpu_custom_call.1} parent=39 // pred_region
          %s235 = sand.u32 %s27, 1
          %s236 = sand.u32 %s27, 1
          %s237 = smul.addr %s236, 64
          %s238 = scalar_lea.vmem [#allocation3], %s237
          %s239 = smul.u32 2, %s17
          %s240 = smul.addr %s239, 8
          %s241 = scalar_lea.vmem %s0, %s240
          // Predicated region
          $region45: #{tpu_custom_call.1} parent=43 // pred_check
            _
          $region46: #{tpu_custom_call.1} parent=43 // pred_check_branch
            %243 = sbr.rel (0) target = $region48
          $region47: #{tpu_custom_call.1} parent=43 // pred_region
            // Predicated region
            $region49: #{tpu_custom_call.1} parent=47 // pred_check
              _
            $region50: #{tpu_custom_call.1} parent=47 // pred_check_branch
              %245 = sbr.rel (0) target = $region52
            $region51: #{tpu_custom_call.1} parent=47 // pred_region
              loop: start=0, step=1, limit=1
              $region53: #{tpu_custom_call.1} parent=51 // loop_pre_header
                _
              $region54: #{tpu_custom_call.1} parent=51 // loop_header
                %s247 = sphi 0, %s251
                %p248 = scmp.ge.s32.totalorder %s247, 1
                %s252 = sphi %s241, %s241
                %s253 = sphi %s238, %s238
              $region55: #{tpu_custom_call.1} parent=51 // loop_header_branch
                %250 = sbr.rel (%p248) target = $region59
              $region56: #{tpu_custom_call.1} parent=51 // loop_body
                %v254 = vld [vmem:[%s252] sm:$0xff]
                %255 = vst [vmem:[%s253] sm:$0xff] %v254
                %v256 = vld [vmem:[%s252 + $0x8] sm:$0xff]
                %257 = vst [vmem:[%s253 + $0x8] sm:$0xff] %v256
                %v258 = vld [vmem:[%s252 + $0x20] sm:$0xff]
                %259 = vst [vmem:[%s253 + $0x10] sm:$0xff] %v258
                %v260 = vld [vmem:[%s252 + $0x28] sm:$0xff]
                %261 = vst [vmem:[%s253 + $0x18] sm:$0xff] %v260
                %v262 = vld [vmem:[%s252 + $0x40] sm:$0xff]
                %263 = vst [vmem:[%s253 + $0x20] sm:$0xff] %v262
                %v264 = vld [vmem:[%s252 + $0x48] sm:$0xff]
                %265 = vst [vmem:[%s253 + $0x28] sm:$0xff] %v264
                %v266 = vld [vmem:[%s252 + $0x60] sm:$0xff]
                %267 = vst [vmem:[%s253 + $0x30] sm:$0xff] %v266
                %v268 = vld [vmem:[%s252 + $0x68] sm:$0xff]
                %269 = vst [vmem:[%s253 + $0x38] sm:$0xff] %v268
              $region57: #{tpu_custom_call.1} parent=51 // loop_footer
                %s251 = sadd.s32 1, %s247
              $region58: #{tpu_custom_call.1} parent=51 // loop_footer_branch
                %246 = sbr.rel target = $region54
              $region59: #{tpu_custom_call.1} parent=51 // loop_exit
                _
            $region52: #{tpu_custom_call.1} parent=47 // pred_fallthru
              _
            // Predicated region
            $region60: #{tpu_custom_call.1} parent=47 // pred_check
              _
            $region61: #{tpu_custom_call.1} parent=47 // pred_check_branch
              %271 = sbr.rel target = $region63
            $region62: #{tpu_custom_call.1} parent=47 // pred_region
              _
            $region63: #{tpu_custom_call.1} parent=47 // pred_fallthru
              _
          $region48: #{tpu_custom_call.1} parent=43 // pred_fallthru
            _
          %272 = vnop
        $region44: #{tpu_custom_call.1} parent=39 // pred_fallthru
          _
      $region40: #{tpu_custom_call.1} parent=5 // pred_fallthru
        _
      %p273 = scmp.le.s32.totalorder 1, %s17
      %p274 = scmp.lt.s32.totalorder %s17, 3
      %p275 = pnand %p273, %p274
      %p276 = pneg %p275
      // Predicated region
      $region64: #{tpu_custom_call.1} parent=5 // pred_check
        _
      $region65: #{tpu_custom_call.1} parent=5 // pred_check_branch
        %278 = sbr.rel (%p275) target = $region67
      $region66: #{tpu_custom_call.1} parent=5 // pred_region
        %s279 = ssub.s32 %s17, 1
        %s280 = sand.u32 %s30, 1
        %s281 = sand.u32 %s30, 1
        %s282 = smul.addr %s281, 64
        %s283 = scalar_lea.vmem [#allocation3], %s282
        // Predicated region
        $region68: #{tpu_custom_call.1} parent=66 // pred_check
          %p284 = pneg %p43
        $region69: #{tpu_custom_call.1} parent=66 // pred_check_branch
          %286 = sbr.rel (%p284) target = $region71
        $region70: #{tpu_custom_call.1} parent=66 // pred_region
          _
        $region71: #{tpu_custom_call.1} parent=66 // pred_fallthru
          _
        %s287 = sand.u32 %s30, 1
        %s288 = sand.u32 %s30, 1
        %s289 = smul.addr %s288, 64
        %s290 = scalar_lea.vmem [#allocation3], %s289
        %p291 = pneg %p43
        %p292 = pneg %p40
        %p293 = pneg %p64
        %p294 = pneg %p61
        %p295 = pneg %p85
        %p296 = pneg %p82
        %p297 = pneg %p106
        %p298 = pneg %p103
        %p299 = pneg %p127
        %p300 = pneg %p124
        %p301 = pneg %p148
        %p302 = pneg %p145
        %p303 = pneg %p169
        %p304 = pneg %p166
        %p305 = pneg %p195
        %p306 = pneg %p192
        %s307 = sand.u32 %s182, 1
        %s308 = scalar_lea.sflag [#allocation5], %s307
        %s309 = sand.u32 %s182, 1
        %s310 = smul.addr %s309, 2
        %s311 = scalar_lea.vmem [#allocation4], %s310
        %s312 = smul.u32 2, %s22
        %s313 = smul.u32 2, %s22
        %v314 = vld [vmem:[%s283] sm:$0xff]
        %v315 = vld [vmem:[%s283 + $0x8] sm:$0xff]
        %v316 = vld [vmem:[%s283 + $0x10] sm:$0xff]
        %v317 = vld [vmem:[%s283 + $0x18] sm:$0xff]
        %v318 = vld [vmem:[%s283 + $0x20] sm:$0xff]
        %v319 = vld [vmem:[%s283 + $0x28] sm:$0xff]
        %v320 = vld [vmem:[%s283 + $0x30] sm:$0xff]
        %v321 = vld [vmem:[%s283 + $0x38] sm:$0xff]
        %v322 = vld [vmem:[%s1] sm:$0xff]
        %v323 = vld [vmem:[%s1 + $0x8] sm:$0xff]
        %v324 = vld [vmem:[%s1 + $0x10] sm:$0xff]
        %v325 = vld [vmem:[%s1 + $0x18] sm:$0xff]
        %v326 = vld [vmem:[%s1 + $0x20] sm:$0xff]
        %v327 = vld [vmem:[%s1 + $0x28] sm:$0xff]
        %v328 = vld [vmem:[%s1 + $0x30] sm:$0xff]
        %v329 = vld [vmem:[%s1 + $0x38] sm:$0xff]
        %v330 = vld [vmem:[%s1 + $0x40] sm:$0xff]
        %v331 = vld [vmem:[%s1 + $0x48] sm:$0xff]
        %v332 = vld [vmem:[%s1 + $0x50] sm:$0xff]
        %v333 = vld [vmem:[%s1 + $0x58] sm:$0xff]
        %v334 = vld [vmem:[%s1 + $0x60] sm:$0xff]
        %v335 = vld [vmem:[%s1 + $0x68] sm:$0xff]
        %v336 = vld [vmem:[%s1 + $0x70] sm:$0xff]
        %v337 = vld [vmem:[%s1 + $0x78] sm:$0xff]
        %v338 = vld [vmem:[%s2] sm:$0xff]
        %v339 = vld [vmem:[%s2 + $0x8] sm:$0xff]
        %v340 = vld [vmem:[%s2 + $0x10] sm:$0xff]
        %v341 = vld [vmem:[%s2 + $0x18] sm:$0xff]
        %v342 = vld [vmem:[%s2 + $0x20] sm:$0xff]
        %v343 = vld [vmem:[%s2 + $0x28] sm:$0xff]
        %v344 = vld [vmem:[%s2 + $0x30] sm:$0xff]
        %v345 = vld [vmem:[%s2 + $0x38] sm:$0xff]
        %v346 = vld [vmem:[%s2 + $0x40] sm:$0xff]
        %v347 = vld [vmem:[%s2 + $0x48] sm:$0xff]
        %v348 = vld [vmem:[%s2 + $0x50] sm:$0xff]
        %v349 = vld [vmem:[%s2 + $0x58] sm:$0xff]
        %v350 = vld [vmem:[%s2 + $0x60] sm:$0xff]
        %v351 = vld [vmem:[%s2 + $0x68] sm:$0xff]
        %v352 = vld [vmem:[%s2 + $0x70] sm:$0xff]
        %v353 = vld [vmem:[%s2 + $0x78] sm:$0xff]
        %355 = vset.pattern.permute.xlu0 0
        %356 = vperm.xlu0 %355, %v338
        %v357 = vpop.permute.xlu0 %356
        %360 = vset.pattern.permute.xlu0 0
        %361 = vperm.xlu0 %360, %v339
        %v362 = vpop.permute.xlu0 %361
        %365 = vset.pattern.permute.xlu0 0
        %366 = vperm.xlu0 %365, %v340
        %v367 = vpop.permute.xlu0 %366
        %370 = vset.pattern.permute.xlu0 0
        %371 = vperm.xlu0 %370, %v341
        %v372 = vpop.permute.xlu0 %371
        %375 = vset.pattern.permute.xlu0 0
        %376 = vperm.xlu0 %375, %v342
        %v377 = vpop.permute.xlu0 %376
        %380 = vset.pattern.permute.xlu0 0
        %381 = vperm.xlu0 %380, %v343
        %v382 = vpop.permute.xlu0 %381
        %385 = vset.pattern.permute.xlu0 0
        %386 = vperm.xlu0 %385, %v344
        %v387 = vpop.permute.xlu0 %386
        %390 = vset.pattern.permute.xlu0 0
        %391 = vperm.xlu0 %390, %v345
        %v392 = vpop.permute.xlu0 %391
        %395 = vset.pattern.permute.xlu0 0
        %396 = vperm.xlu0 %395, %v346
        %v397 = vpop.permute.xlu0 %396
        %400 = vset.pattern.permute.xlu0 0
        %401 = vperm.xlu0 %400, %v347
        %v402 = vpop.permute.xlu0 %401
        %405 = vset.pattern.permute.xlu0 0
        %406 = vperm.xlu0 %405, %v348
        %v407 = vpop.permute.xlu0 %406
        %410 = vset.pattern.permute.xlu0 0
        %411 = vperm.xlu0 %410, %v349
        %v412 = vpop.permute.xlu0 %411
        %415 = vset.pattern.permute.xlu0 0
        %416 = vperm.xlu0 %415, %v350
        %v417 = vpop.permute.xlu0 %416
        %420 = vset.pattern.permute.xlu0 0
        %421 = vperm.xlu0 %420, %v351
        %v422 = vpop.permute.xlu0 %421
        %425 = vset.pattern.permute.xlu0 0
        %426 = vperm.xlu0 %425, %v352
        %v427 = vpop.permute.xlu0 %426
        %430 = vset.pattern.permute.xlu0 0
        %431 = vperm.xlu0 %430, %v353
        %v432 = vpop.permute.xlu0 %431
        %vm434 = vcmask 261120
        %v436 = vsel %vm434, %v322, 0
        %v439 = vsel %vm434, %v323, 0
        %v442 = vsel %vm434, %v324, 0
        %v445 = vsel %vm434, %v325, 0
        %v448 = vsel %vm434, %v326, 0
        %v451 = vsel %vm434, %v327, 0
        %v454 = vsel %vm434, %v328, 0
        %v457 = vsel %vm434, %v329, 0
        %v460 = vsel %vm434, %v330, 0
        %v463 = vsel %vm434, %v331, 0
        %v466 = vsel %vm434, %v332, 0
        %v469 = vsel %vm434, %v333, 0
        %v472 = vsel %vm434, %v334, 0
        %v475 = vsel %vm434, %v335, 0
        %v478 = vsel %vm434, %v336, 0
        %v481 = vsel %vm434, %v337, 0
        %483 = vmatprep.subr.mxu0 %v315
        %484 = vmatpush1.msra.mxu0 %v314
        %485 = vmatprep.subr.mxu0 %v317
        %486 = vmatpush1.msra.mxu0 %v316
        %487 = vmatprep.subr.mxu0 %v319
        %488 = vmatpush1.msra.mxu0 %v318
        %489 = vmatprep.subr.mxu0 %v321
        %490 = vmatpush1.msra.mxu0 %v320
        %491 = vmatprep.subr.mxu0 0.0
        %492 = vmatpush1.msra.mxu0 0.0
        %493 = vmatprep.subr.mxu0 0.0
        %494 = vmatpush1.msra.mxu0 0.0
        %495 = vmatprep.subr.mxu0 0.0
        %496 = vmatpush1.msra.mxu0 0.0
        %497 = vmatprep.subr.mxu0 0.0
        %498 = vmatpush1.msra.mxu0 0.0
        %499 = vmatprep.subr.mxu0 0.0
        %500 = vmatpush1.msra.mxu0 0.0
        %501 = vmatprep.subr.mxu0 0.0
        %502 = vmatpush1.msra.mxu0 0.0
        %503 = vmatprep.subr.mxu0 0.0
        %504 = vmatpush1.msra.mxu0 0.0
        %505 = vmatprep.subr.mxu0 0.0
        %506 = vmatpush1.msra.mxu0 0.0
        %507 = vmatprep.subr.mxu0 0.0
        %508 = vmatpush1.msra.mxu0 0.0
        %509 = vmatprep.subr.mxu0 0.0
        %510 = vmatpush1.msra.mxu0 0.0
        %511 = vmatprep.subr.mxu0 0.0
        %512 = vmatpush1.msra.mxu0 0.0
        %513 = vmatprep.subr.mxu0 0.0
        %514 = vmatpush1.msra.mxu0 0.0
        %515 = vmatprep.subr.mxu0 0.0
        %516 = vmatpush1.msra.mxu0 0.0
        %517 = vmatprep.subr.mxu0 0.0
        %518 = vmatpush1.msra.mxu0 0.0
        %519 = vmatprep.subr.mxu0 0.0
        %520 = vmatpush1.msra.mxu0 0.0
        %521 = vmatprep.subr.mxu0 0.0
        %522 = vmatpush1.msra.mxu0 0.0
        %523 = vmatprep.subr.mxu0 0.0
        %524 = vmatpush1.msra.mxu0 0.0
        %525 = vmatprep.subr.mxu0 0.0
        %526 = vmatpush1.msra.mxu0 0.0
        %527 = vmatprep.subr.mxu0 0.0
        %528 = vmatpush1.msra.mxu0 0.0
        %529 = vmatprep.subr.mxu0 0.0
        %530 = vmatpush1.msra.mxu0 0.0
        %531 = vmatprep.subr.mxu0 0.0
        %532 = vmatpush1.msra.mxu0 0.0
        %533 = vmatprep.subr.mxu0 0.0
        %534 = vmatpush1.msra.mxu0 0.0
        %535 = vmatprep.subr.mxu0 0.0
        %536 = vmatpush1.msra.mxu0 0.0
        %537 = vmatprep.subr.mxu0 0.0
        %538 = vmatpush1.msra.mxu0 0.0
        %539 = vmatprep.subr.mxu0 0.0
        %540 = vmatpush1.msra.mxu0 0.0
        %541 = vmatprep.subr.mxu0 0.0
        %542 = vmatpush1.msra.mxu0 0.0
        %543 = vmatprep.subr.mxu0 0.0
        %544 = vmatpush1.msra.mxu0 0.0
        %545 = vmatprep.subr.mxu0 0.0
        %546 = vmatpush1.msra.mxu0 0.0
        %547 = vmatprep.mubr.f32.mxu0 0.0
        %548 = vmatmul.mubr.f32.gmra.mrb[0].mxu0 %v436
        %v549 = vpop.f32.mrb[0].mxu0
        %v550 = vadd.f32 %v357, %v549
        %v551 = vpop.f32.mrb[0].mxu0
        %v552 = vadd.f32 %v357, %v551
        %553 = vmatprep.mubr.f32.mxu0 0.0
        %554 = vmatmul.mubr.f32.gmra.mrb[0].mxu0 %v439
        %v555 = vpop.f32.mrb[0].mxu0
        %v556 = vadd.f32 %v362, %v555
        %v557 = vpop.f32.mrb[0].mxu0
        %v558 = vadd.f32 %v362, %v557
        %559 = vmatprep.mubr.f32.mxu0 0.0
        %560 = vmatmul.mubr.f32.gmra.mrb[0].mxu0 %v442
        %v561 = vpop.f32.mrb[0].mxu0
        %v562 = vadd.f32 %v367, %v561
        %v563 = vpop.f32.mrb[0].mxu0
        %v564 = vadd.f32 %v367, %v563
        %565 = vmatprep.mubr.f32.mxu0 0.0
        %566 = vmatmul.mubr.f32.gmra.mrb[0].mxu0 %v445
        %v567 = vpop.f32.mrb[0].mxu0
        %v568 = vadd.f32 %v372, %v567
        %v569 = vpop.f32.mrb[0].mxu0
        %v570 = vadd.f32 %v372, %v569
        %571 = vmatprep.mubr.f32.mxu0 0.0
        %572 = vmatmul.mubr.f32.gmra.mrb[0].mxu0 %v448
        %v573 = vpop.f32.mrb[0].mxu0
        %v574 = vadd.f32 %v377, %v573
        %v575 = vpop.f32.mrb[0].mxu0
        %v576 = vadd.f32 %v377, %v575
        %577 = vmatprep.mubr.f32.mxu0 0.0
        %578 = vmatmul.mubr.f32.gmra.mrb[0].mxu0 %v451
        %v579 = vpop.f32.mrb[0].mxu0
        %v580 = vadd.f32 %v382, %v579
        %v581 = vpop.f32.mrb[0].mxu0
        %v582 = vadd.f32 %v382, %v581
        %583 = vmatprep.mubr.f32.mxu0 0.0
        %584 = vmatmul.mubr.f32.gmra.mrb[0].mxu0 %v454
        %v585 = vpop.f32.mrb[0].mxu0
        %v586 = vadd.f32 %v387, %v585
        %v587 = vpop.f32.mrb[0].mxu0
        %v588 = vadd.f32 %v387, %v587
        %589 = vmatprep.mubr.f32.mxu0 0.0
        %590 = vmatmul.mubr.f32.gmra.mrb[0].mxu0 %v457
        %v591 = vpop.f32.mrb[0].mxu0
        %v592 = vadd.f32 %v392, %v591
        %v593 = vpop.f32.mrb[0].mxu0
        %v594 = vadd.f32 %v392, %v593
        %595 = vmatprep.mubr.f32.mxu0 0.0
        %596 = vmatmul.mubr.f32.gmra.mrb[0].mxu0 %v460
        %v597 = vpop.f32.mrb[0].mxu0
        %v598 = vadd.f32 %v397, %v597
        %v599 = vpop.f32.mrb[0].mxu0
        %v600 = vadd.f32 %v397, %v599
        %601 = vmatprep.mubr.f32.mxu0 0.0
        %602 = vmatmul.mubr.f32.gmra.mrb[0].mxu0 %v463
        %v603 = vpop.f32.mrb[0].mxu0
        %v604 = vadd.f32 %v402, %v603
        %v605 = vpop.f32.mrb[0].mxu0
        %v606 = vadd.f32 %v402, %v605
        %607 = vmatprep.mubr.f32.mxu0 0.0
        %608 = vmatmul.mubr.f32.gmra.mrb[0].mxu0 %v466
        %v609 = vpop.f32.mrb[0].mxu0
        %v610 = vadd.f32 %v407, %v609
        %v611 = vpop.f32.mrb[0].mxu0
        %v612 = vadd.f32 %v407, %v611
        %613 = vmatprep.mubr.f32.mxu0 0.0
        %614 = vmatmul.mubr.f32.gmra.mrb[0].mxu0 %v469
        %v615 = vpop.f32.mrb[0].mxu0
        %v616 = vadd.f32 %v412, %v615
        %v617 = vpop.f32.mrb[0].mxu0
        %v618 = vadd.f32 %v412, %v617
        %619 = vmatprep.mubr.f32.mxu0 0.0
        %620 = vmatmul.mubr.f32.gmra.mrb[0].mxu0 %v472
        %v621 = vpop.f32.mrb[0].mxu0
        %v622 = vadd.f32 %v417, %v621
        %v623 = vpop.f32.mrb[0].mxu0
        %v624 = vadd.f32 %v417, %v623
        %625 = vmatprep.mubr.f32.mxu0 0.0
        %626 = vmatmul.mubr.f32.gmra.mrb[0].mxu0 %v475
        %v627 = vpop.f32.mrb[0].mxu0
        %v628 = vadd.f32 %v422, %v627
        %v629 = vpop.f32.mrb[0].mxu0
        %v630 = vadd.f32 %v422, %v629
        %631 = vmatprep.mubr.f32.mxu0 0.0
        %632 = vmatmul.mubr.f32.gmra.mrb[0].mxu0 %v478
        %v633 = vpop.f32.mrb[0].mxu0
        %v634 = vadd.f32 %v427, %v633
        %v635 = vpop.f32.mrb[0].mxu0
        %v636 = vadd.f32 %v427, %v635
        %637 = vmatprep.mubr.f32.mxu0 0.0
        %638 = vmatmul.mubr.f32.gmra.mrb[0].mxu0 %v481
        %v639 = vpop.f32.mrb[0].mxu0
        %v640 = vadd.f32 %v432, %v639
        %v641 = vpop.f32.mrb[0].mxu0
        %v642 = vadd.f32 %v432, %v641
        %643 = vdwg.mxu0
        %v644 = vtanh.pop %v550
        %v645 = vtanh.pop %v552
        %v646 = vtanh.pop %v556
        %v647 = vtanh.pop %v558
        %v648 = vtanh.pop %v562
        %v649 = vtanh.pop %v564
        %v650 = vtanh.pop %v568
        %v651 = vtanh.pop %v570
        %v652 = vtanh.pop %v574
        %v653 = vtanh.pop %v576
        %v654 = vtanh.pop %v580
        %v655 = vtanh.pop %v582
        %v656 = vtanh.pop %v586
        %v657 = vtanh.pop %v588
        %v658 = vtanh.pop %v592
        %v659 = vtanh.pop %v594
        %v660 = vtanh.pop %v598
        %v661 = vtanh.pop %v600
        %v662 = vtanh.pop %v604
        %v663 = vtanh.pop %v606
        %v664 = vtanh.pop %v610
        %v665 = vtanh.pop %v612
        %v666 = vtanh.pop %v616
        %v667 = vtanh.pop %v618
        %v668 = vtanh.pop %v622
        %v669 = vtanh.pop %v624
        %v670 = vtanh.pop %v628
        %v671 = vtanh.pop %v630
        %v672 = vtanh.pop %v634
        %v673 = vtanh.pop %v636
        %v674 = vtanh.pop %v640
        %v675 = vtanh.pop %v642
        %v676 = vld [vmem:[%s3] sm:$0xff]
        %v677 = vld [vmem:[%s3 + $0x8] sm:$0xff]
        %v678 = vld [vmem:[%s3 + $0x10] sm:$0xff]
        %v679 = vld [vmem:[%s3 + $0x18] sm:$0xff]
        %v680 = vld [vmem:[%s3 + $0x20] sm:$0xff]
        %v681 = vld [vmem:[%s3 + $0x28] sm:$0xff]
        %v682 = vld [vmem:[%s3 + $0x30] sm:$0xff]
        %v683 = vld [vmem:[%s3 + $0x38] sm:$0xff]
        %v684 = vld [vmem:[%s3 + $0x40] sm:$0xff]
        %v685 = vld [vmem:[%s3 + $0x48] sm:$0xff]
        %v686 = vld [vmem:[%s3 + $0x50] sm:$0xff]
        %v687 = vld [vmem:[%s3 + $0x58] sm:$0xff]
        %v688 = vld [vmem:[%s3 + $0x60] sm:$0xff]
        %v689 = vld [vmem:[%s3 + $0x68] sm:$0xff]
        %v690 = vld [vmem:[%s3 + $0x70] sm:$0xff]
        %v691 = vld [vmem:[%s3 + $0x78] sm:$0xff]
        %v692 = vld [vmem:[%s4] sm:$0xff]
        %v693 = vld [vmem:[%s4 + $0x8] sm:$0xff]
        %v694 = vld [vmem:[%s4 + $0x10] sm:$0xff]
        %v695 = vld [vmem:[%s4 + $0x18] sm:$0xff]
        %v696 = vld [vmem:[%s4 + $0x20] sm:$0xff]
        %v697 = vld [vmem:[%s4 + $0x28] sm:$0xff]
        %v698 = vld [vmem:[%s4 + $0x30] sm:$0xff]
        %v699 = vld [vmem:[%s4 + $0x38] sm:$0xff]
        %v700 = vld [vmem:[%s4 + $0x40] sm:$0xff]
        %v701 = vld [vmem:[%s4 + $0x48] sm:$0xff]
        %v702 = vld [vmem:[%s4 + $0x50] sm:$0xff]
        %v703 = vld [vmem:[%s4 + $0x58] sm:$0xff]
        %v704 = vld [vmem:[%s4 + $0x60] sm:$0xff]
        %v705 = vld [vmem:[%s4 + $0x68] sm:$0xff]
        %v706 = vld [vmem:[%s4 + $0x70] sm:$0xff]
        %v707 = vld [vmem:[%s4 + $0x78] sm:$0xff]
        %709 = vset.pattern.permute.xlu0 0
        %710 = vperm.xlu0 %709, %v692
        %v711 = vpop.permute.xlu0 %710
        %714 = vset.pattern.permute.xlu0 0
        %715 = vperm.xlu0 %714, %v693
        %v716 = vpop.permute.xlu0 %715
        %719 = vset.pattern.permute.xlu0 0
        %720 = vperm.xlu0 %719, %v694
        %v721 = vpop.permute.xlu0 %720
        %724 = vset.pattern.permute.xlu0 0
        %725 = vperm.xlu0 %724, %v695
        %v726 = vpop.permute.xlu0 %725
        %729 = vset.pattern.permute.xlu0 0
        %730 = vperm.xlu0 %729, %v696
        %v731 = vpop.permute.xlu0 %730
        %734 = vset.pattern.permute.xlu0 0
        %735 = vperm.xlu0 %734, %v697
        %v736 = vpop.permute.xlu0 %735
        %739 = vset.pattern.permute.xlu0 0
        %740 = vperm.xlu0 %739, %v698
        %v741 = vpop.permute.xlu0 %740
        %744 = vset.pattern.permute.xlu0 0
        %745 = vperm.xlu0 %744, %v699
        %v746 = vpop.permute.xlu0 %745
        %749 = vset.pattern.permute.xlu0 0
        %750 = vperm.xlu0 %749, %v700
        %v751 = vpop.permute.xlu0 %750
        %754 = vset.pattern.permute.xlu0 0
        %755 = vperm.xlu0 %754, %v701
        %v756 = vpop.permute.xlu0 %755
        %759 = vset.pattern.permute.xlu0 0
        %760 = vperm.xlu0 %759, %v702
        %v761 = vpop.permute.xlu0 %760
        %764 = vset.pattern.permute.xlu0 0
        %765 = vperm.xlu0 %764, %v703
        %v766 = vpop.permute.xlu0 %765
        %769 = vset.pattern.permute.xlu0 0
        %770 = vperm.xlu0 %769, %v704
        %v771 = vpop.permute.xlu0 %770
        %774 = vset.pattern.permute.xlu0 0
        %775 = vperm.xlu0 %774, %v705
        %v776 = vpop.permute.xlu0 %775
        %779 = vset.pattern.permute.xlu0 0
        %780 = vperm.xlu0 %779, %v706
        %v781 = vpop.permute.xlu0 %780
        %784 = vset.pattern.permute.xlu0 0
        %785 = vperm.xlu0 %784, %v707
        %v786 = vpop.permute.xlu0 %785
        %788 = vmatprep.subr.mxu0 %v645
        %789 = vmatpush1.msra.mxu0 %v644
        %790 = vmatprep.subr.mxu0 %v647
        %791 = vmatpush1.msra.mxu0 %v646
        %792 = vmatprep.subr.mxu0 %v649
        %793 = vmatpush1.msra.mxu0 %v648
        %794 = vmatprep.subr.mxu0 %v651
        %795 = vmatpush1.msra.mxu0 %v650
        %796 = vmatprep.subr.mxu0 %v653
        %797 = vmatpush1.msra.mxu0 %v652
        %798 = vmatprep.subr.mxu0 %v655
        %799 = vmatpush1.msra.mxu0 %v654
        %800 = vmatprep.subr.mxu0 %v657
        %801 = vmatpush1.msra.mxu0 %v656
        %802 = vmatprep.subr.mxu0 %v659
        %803 = vmatpush1.msra.mxu0 %v658
        %804 = vmatprep.subr.mxu0 %v661
        %805 = vmatpush1.msra.mxu0 %v660
        %806 = vmatprep.subr.mxu0 %v663
        %807 = vmatpush1.msra.mxu0 %v662
        %808 = vmatprep.subr.mxu0 %v665
        %809 = vmatpush1.msra.mxu0 %v664
        %810 = vmatprep.subr.mxu0 %v667
        %811 = vmatpush1.msra.mxu0 %v666
        %812 = vmatprep.subr.mxu0 %v669
        %813 = vmatpush1.msra.mxu0 %v668
        %814 = vmatprep.subr.mxu0 %v671
        %815 = vmatpush1.msra.mxu0 %v670
        %816 = vmatprep.subr.mxu0 %v673
        %817 = vmatpush1.msra.mxu0 %v672
        %818 = vmatprep.subr.mxu0 %v675
        %819 = vmatpush1.msra.mxu0 %v674
        %820 = vmatprep.subr.mxu0 0.0
        %821 = vmatpush1.msra.mxu0 0.0
        %822 = vmatprep.subr.mxu0 0.0
        %823 = vmatpush1.msra.mxu0 0.0
        %824 = vmatprep.subr.mxu0 0.0
        %825 = vmatpush1.msra.mxu0 0.0
        %826 = vmatprep.subr.mxu0 0.0
        %827 = vmatpush1.msra.mxu0 0.0
        %828 = vmatprep.subr.mxu0 0.0
        %829 = vmatpush1.msra.mxu0 0.0
        %830 = vmatprep.subr.mxu0 0.0
        %831 = vmatpush1.msra.mxu0 0.0
        %832 = vmatprep.subr.mxu0 0.0
        %833 = vmatpush1.msra.mxu0 0.0
        %834 = vmatprep.subr.mxu0 0.0
        %835 = vmatpush1.msra.mxu0 0.0
        %836 = vmatprep.subr.mxu0 0.0
        %837 = vmatpush1.msra.mxu0 0.0
        %838 = vmatprep.subr.mxu0 0.0
        %839 = vmatpush1.msra.mxu0 0.0
        %840 = vmatprep.subr.mxu0 0.0
        %841 = vmatpush1.msra.mxu0 0.0
        %842 = vmatprep.subr.mxu0 0.0
        %843 = vmatpush1.msra.mxu0 0.0
        %844 = vmatprep.subr.mxu0 0.0
        %845 = vmatpush1.msra.mxu0 0.0
        %846 = vmatprep.subr.mxu0 0.0
        %847 = vmatpush1.msra.mxu0 0.0
        %848 = vmatprep.subr.mxu0 0.0
        %849 = vmatpush1.msra.mxu0 0.0
        %850 = vmatprep.subr.mxu0 0.0
        %851 = vmatpush1.msra.mxu0 0.0
        %852 = vmatprep.mubr.f32.mxu0 0.0
        %853 = vmatmul.mubr.f32.gmra.mrb[0].mxu0 %v676
        %v854 = vpop.f32.mrb[0].mxu0
        %v855 = vadd.f32 %v711, %v854
        %v856 = vpop.f32.mrb[0].mxu0
        %v857 = vadd.f32 %v711, %v856
        %858 = vmatprep.mubr.f32.mxu0 0.0
        %859 = vmatmul.mubr.f32.gmra.mrb[0].mxu0 %v677
        %v860 = vpop.f32.mrb[0].mxu0
        %v861 = vadd.f32 %v716, %v860
        %v862 = vpop.f32.mrb[0].mxu0
        %v863 = vadd.f32 %v716, %v862
        %864 = vmatprep.mubr.f32.mxu0 0.0
        %865 = vmatmul.mubr.f32.gmra.mrb[0].mxu0 %v678
        %v866 = vpop.f32.mrb[0].mxu0
        %v867 = vadd.f32 %v721, %v866
        %v868 = vpop.f32.mrb[0].mxu0
        %v869 = vadd.f32 %v721, %v868
        %870 = vmatprep.mubr.f32.mxu0 0.0
        %871 = vmatmul.mubr.f32.gmra.mrb[0].mxu0 %v679
        %v872 = vpop.f32.mrb[0].mxu0
        %v873 = vadd.f32 %v726, %v872
        %v874 = vpop.f32.mrb[0].mxu0
        %v875 = vadd.f32 %v726, %v874
        %876 = vmatprep.mubr.f32.mxu0 0.0
        %877 = vmatmul.mubr.f32.gmra.mrb[0].mxu0 %v680
        %v878 = vpop.f32.mrb[0].mxu0
        %v879 = vadd.f32 %v731, %v878
        %v880 = vpop.f32.mrb[0].mxu0
        %v881 = vadd.f32 %v731, %v880
        %882 = vmatprep.mubr.f32.mxu0 0.0
        %883 = vmatmul.mubr.f32.gmra.mrb[0].mxu0 %v681
        %v884 = vpop.f32.mrb[0].mxu0
        %v885 = vadd.f32 %v736, %v884
        %v886 = vpop.f32.mrb[0].mxu0
        %v887 = vadd.f32 %v736, %v886
        %888 = vmatprep.mubr.f32.mxu0 0.0
        %889 = vmatmul.mubr.f32.gmra.mrb[0].mxu0 %v682
        %v890 = vpop.f32.mrb[0].mxu0
        %v891 = vadd.f32 %v741, %v890
        %v892 = vpop.f32.mrb[0].mxu0
        %v893 = vadd.f32 %v741, %v892
        %894 = vmatprep.mubr.f32.mxu0 0.0
        %895 = vmatmul.mubr.f32.gmra.mrb[0].mxu0 %v683
        %v896 = vpop.f32.mrb[0].mxu0
        %v897 = vadd.f32 %v746, %v896
        %v898 = vpop.f32.mrb[0].mxu0
        %v899 = vadd.f32 %v746, %v898
        %900 = vmatprep.mubr.f32.mxu0 0.0
        %901 = vmatmul.mubr.f32.gmra.mrb[0].mxu0 %v684
        %v902 = vpop.f32.mrb[0].mxu0
        %v903 = vadd.f32 %v751, %v902
        %v904 = vpop.f32.mrb[0].mxu0
        %v905 = vadd.f32 %v751, %v904
        %906 = vmatprep.mubr.f32.mxu0 0.0
        %907 = vmatmul.mubr.f32.gmra.mrb[0].mxu0 %v685
        %v908 = vpop.f32.mrb[0].mxu0
        %v909 = vadd.f32 %v756, %v908
        %v910 = vpop.f32.mrb[0].mxu0
        %v911 = vadd.f32 %v756, %v910
        %912 = vmatprep.mubr.f32.mxu0 0.0
        %913 = vmatmul.mubr.f32.gmra.mrb[0].mxu0 %v686
        %v914 = vpop.f32.mrb[0].mxu0
        %v915 = vadd.f32 %v761, %v914
        %v916 = vpop.f32.mrb[0].mxu0
        %v917 = vadd.f32 %v761, %v916
        %918 = vmatprep.mubr.f32.mxu0 0.0
        %919 = vmatmul.mubr.f32.gmra.mrb[0].mxu0 %v687
        %v920 = vpop.f32.mrb[0].mxu0
        %v921 = vadd.f32 %v766, %v920
        %v922 = vpop.f32.mrb[0].mxu0
        %v923 = vadd.f32 %v766, %v922
        %924 = vmatprep.mubr.f32.mxu0 0.0
        %925 = vmatmul.mubr.f32.gmra.mrb[0].mxu0 %v688
        %v926 = vpop.f32.mrb[0].mxu0
        %v927 = vadd.f32 %v771, %v926
        %v928 = vpop.f32.mrb[0].mxu0
        %v929 = vadd.f32 %v771, %v928
        %930 = vmatprep.mubr.f32.mxu0 0.0
        %931 = vmatmul.mubr.f32.gmra.mrb[0].mxu0 %v689
        %v932 = vpop.f32.mrb[0].mxu0
        %v933 = vadd.f32 %v776, %v932
        %v934 = vpop.f32.mrb[0].mxu0
        %v935 = vadd.f32 %v776, %v934
        %936 = vmatprep.mubr.f32.mxu0 0.0
        %937 = vmatmul.mubr.f32.gmra.mrb[0].mxu0 %v690
        %v938 = vpop.f32.mrb[0].mxu0
        %v939 = vadd.f32 %v781, %v938
        %v940 = vpop.f32.mrb[0].mxu0
        %v941 = vadd.f32 %v781, %v940
        %942 = vmatprep.mubr.f32.mxu0 0.0
        %943 = vmatmul.mubr.f32.gmra.mrb[0].mxu0 %v691
        %v944 = vpop.f32.mrb[0].mxu0
        %v945 = vadd.f32 %v786, %v944
        %v946 = vpop.f32.mrb[0].mxu0
        %v947 = vadd.f32 %v786, %v946
        %948 = vdwg.mxu0
        %v949 = vtanh.pop %v855
        %v950 = vtanh.pop %v857
        %v951 = vtanh.pop %v861
        %v952 = vtanh.pop %v863
        %v953 = vtanh.pop %v867
        %v954 = vtanh.pop %v869
        %v955 = vtanh.pop %v873
        %v956 = vtanh.pop %v875
        %v957 = vtanh.pop %v879
        %v958 = vtanh.pop %v881
        %v959 = vtanh.pop %v885
        %v960 = vtanh.pop %v887
        %v961 = vtanh.pop %v891
        %v962 = vtanh.pop %v893
        %v963 = vtanh.pop %v897
        %v964 = vtanh.pop %v899
        %v965 = vtanh.pop %v903
        %v966 = vtanh.pop %v905
        %v967 = vtanh.pop %v909
        %v968 = vtanh.pop %v911
        %v969 = vtanh.pop %v915
        %v970 = vtanh.pop %v917
        %v971 = vtanh.pop %v921
        %v972 = vtanh.pop %v923
        %v973 = vtanh.pop %v927
        %v974 = vtanh.pop %v929
        %v975 = vtanh.pop %v933
        %v976 = vtanh.pop %v935
        %v977 = vtanh.pop %v939
        %v978 = vtanh.pop %v941
        %v979 = vtanh.pop %v945
        %v980 = vtanh.pop %v947
        %v981 = vld [vmem:[%s5] sm:$0x1]
        %s982 = sld [smem:[#allocation2]]
        %v983 = vstv %s982
        %984 = vmatprep.subr.mxu0 %v950
        %985 = vmatpush1.msra.mxu0 %v949
        %986 = vmatprep.subr.mxu0 %v952
        %987 = vmatpush1.msra.mxu0 %v951
        %988 = vmatprep.subr.mxu0 %v954
        %989 = vmatpush1.msra.mxu0 %v953
        %990 = vmatprep.subr.mxu0 %v956
        %991 = vmatpush1.msra.mxu0 %v955
        %992 = vmatprep.subr.mxu0 %v958
        %993 = vmatpush1.msra.mxu0 %v957
        %994 = vmatprep.subr.mxu0 %v960
        %995 = vmatpush1.msra.mxu0 %v959
        %996 = vmatprep.subr.mxu0 %v962
        %997 = vmatpush1.msra.mxu0 %v961
        %998 = vmatprep.subr.mxu0 %v964
        %999 = vmatpush1.msra.mxu0 %v963
        %1000 = vmatprep.subr.mxu0 %v966
        %1001 = vmatpush1.msra.mxu0 %v965
        %1002 = vmatprep.subr.mxu0 %v968
        %1003 = vmatpush1.msra.mxu0 %v967
        %1004 = vmatprep.subr.mxu0 %v970
        %1005 = vmatpush1.msra.mxu0 %v969
        %1006 = vmatprep.subr.mxu0 %v972
        %1007 = vmatpush1.msra.mxu0 %v971
        %1008 = vmatprep.subr.mxu0 %v974
        %1009 = vmatpush1.msra.mxu0 %v973
        %1010 = vmatprep.subr.mxu0 %v976
        %1011 = vmatpush1.msra.mxu0 %v975
        %1012 = vmatprep.subr.mxu0 %v978
        %1013 = vmatpush1.msra.mxu0 %v977
        %1014 = vmatprep.subr.mxu0 %v980
        %1015 = vmatpush1.msra.mxu0 %v979
        %1016 = vmatprep.subr.mxu0 0.0
        %1017 = vmatpush1.msra.mxu0 0.0
        %1018 = vmatprep.subr.mxu0 0.0
        %1019 = vmatpush1.msra.mxu0 0.0
        %1020 = vmatprep.subr.mxu0 0.0
        %1021 = vmatpush1.msra.mxu0 0.0
        %1022 = vmatprep.subr.mxu0 0.0
        %1023 = vmatpush1.msra.mxu0 0.0
        %1024 = vmatprep.subr.mxu0 0.0
        %1025 = vmatpush1.msra.mxu0 0.0
        %1026 = vmatprep.subr.mxu0 0.0
        %1027 = vmatpush1.msra.mxu0 0.0
        %1028 = vmatprep.subr.mxu0 0.0
        %1029 = vmatpush1.msra.mxu0 0.0
        %1030 = vmatprep.subr.mxu0 0.0
        %1031 = vmatpush1.msra.mxu0 0.0
        %1032 = vmatprep.subr.mxu0 0.0
        %1033 = vmatpush1.msra.mxu0 0.0
        %1034 = vmatprep.subr.mxu0 0.0
        %1035 = vmatpush1.msra.mxu0 0.0
        %1036 = vmatprep.subr.mxu0 0.0
        %1037 = vmatpush1.msra.mxu0 0.0
        %1038 = vmatprep.subr.mxu0 0.0
        %1039 = vmatpush1.msra.mxu0 0.0
        %1040 = vmatprep.subr.mxu0 0.0
        %1041 = vmatpush1.msra.mxu0 0.0
        %1042 = vmatprep.subr.mxu0 0.0
        %1043 = vmatpush1.msra.mxu0 0.0
        %1044 = vmatprep.subr.mxu0 0.0
        %1045 = vmatpush1.msra.mxu0 0.0
        %1046 = vmatprep.subr.mxu0 0.0
        %1047 = vmatpush1.msra.mxu0 0.0
        %1048 = vmatprep.mubr.f32.mxu0 0.0
        %1049 = vmatmul.mubr.f32.gmra.mrb[0].mxu0 %v981
        %v1050 = vpop.f32.mrb[0].mxu0
        %v1051 = vadd.f32 %v983, %v1050
        %v1052 = vpop.f32.mrb[0].mxu0
        %v1053 = vadd.f32 %v983, %v1052
        %1054 = vdwg.mxu0
        %v1057 = vcombine.low %v1051, %v1053
        %v1059 = vunpack.c.l.s4 1966171168
        %v1060 = vunpack.c.0.s8 %v1059
        %v1061 = vlaneseq
        %v1062 = vshrl.u32 %v1061, 7
        %v1063 = vsub.s32 %v1060, %v1062
        %v1064 = vrot.slane %v1057, %v1063
        %v1066 = vunpack.c.l.s4 1966171168
        %v1067 = vunpack.c.0.s8 %v1066
        %v1068 = vlaneseq
        %v1069 = vshrl.u32 %v1068, 7
        %v1070 = vsub.s32 %v1067, %v1069
        %v1071 = vrot.slane %v1064, %v1070
        %v1073 = vlaneseq
        %vm1074 = vcmp.ge.s32.totalorder %v1073, 0
        %vm1075 = vcmp.lt.s32.totalorder %v1073, 256
        %vm1076 = vmand %vm1074, %vm1075
        %1077 = vst.msk [vmem:[%s311] sm:$0x3] %vm1076, %v1071
        %s1078 = sand.u32 %s182, 1
        %s1079 = scalar_lea.sflag [#allocation5], %s1078
        %s1080 = sand.u32 %s182, 1
        %s1081 = smul.addr %s1080, 2
        %s1082 = scalar_lea.vmem [#allocation4], %s1081
        // Predicated region
        $region72: #{tpu_custom_call.1} parent=66 // pred_check
          %p1083 = pneg %p192
        $region73: #{tpu_custom_call.1} parent=66 // pred_check_branch
          %1085 = sbr.rel (%p1083) target = $region75
        $region74: #{tpu_custom_call.1} parent=66 // pred_region
          %s1086 = smul.u32 2, %s22
          %s1088 = ssub.s32 32, 32
          %1089 = vsyncadd %s1079, %s1088
          %s1090 = smul.addr %s1086, 16
          %s1091 = scalar_lea.hbm %s7, %s1090
          %s1093 = sshll.u32 %s1082, 4
          %s1094 = int_to_ptr.vmem [resolvable:$true] %s1093
          %1096 = dma.vmem_to_hbm [thread:$0]  %s1094, 32, %s1091, %s1079
        $region75: #{tpu_custom_call.1} parent=66 // pred_fallthru
          _
      $region67: #{tpu_custom_call.1} parent=5 // pred_fallthru
        _
      %p1097 = scmp.le.s32.totalorder 2, %s17
      // Predicated region
      $region76: #{tpu_custom_call.1} parent=5 // pred_check
        %p1098 = pneg %p1097
      $region77: #{tpu_custom_call.1} parent=5 // pred_check_branch
        %1100 = sbr.rel (%p1098) target = $region79
      $region78: #{tpu_custom_call.1} parent=5 // pred_region
        %s1101 = ssub.s32 %s17, 2
        // Predicated region
        $region80: #{tpu_custom_call.1} parent=78 // pred_check
          %p1102 = pneg %p198
        $region81: #{tpu_custom_call.1} parent=78 // pred_check_branch
          %1104 = sbr.rel (%p1102) target = $region83
        $region82: #{tpu_custom_call.1} parent=78 // pred_region
          %s1105 = sand.u32 %s183, 1
          %s1106 = scalar_lea.sflag [#allocation5], %s1105
          %s1107 = sand.u32 %s183, 1
          %s1108 = smul.addr %s1107, 2
          %s1109 = scalar_lea.vmem [#allocation4], %s1108
          %1110 = dma.done %s1106, 32
        $region83: #{tpu_custom_call.1} parent=78 // pred_fallthru
          _
      $region79: #{tpu_custom_call.1} parent=5 // pred_fallthru
        _
    $region6: #{tpu_custom_call.1} parent=1 // loop_footer
      %s21 = sadd.s32 1, %s17
    $region7: #{tpu_custom_call.1} parent=1 // loop_footer_branch
      %16 = sbr.rel target = $region3
    $region8: #{tpu_custom_call.1} parent=1 // loop_exit
      _
    %1111 = vsyncpa [#allocation5], 1
    %s1112 = scalar_lea.sflag [#allocation5], 1
    %1113 = vsyncpa %s1112, 1

</llo_original>
